<compile_context>
chip_gen: v5e
topology: v5e:2x2
jax: 0.10.0
libtpu: 0.0.40
codegen_flags: <defaults>
</compile_context>

<pallas_src>
import jax
import jax.numpy as jnp
from jax import lax
from jax.experimental import pallas as pl
from jax.experimental.pallas import tpu as pltpu

_MIB = 1024 * 1024


def _round_up(v, m):
    return (v + m - 1) // m * m


def _vmem_limit_bytes():
    """Generation-aware VMEM budget with headroom for compiler scratch."""
    cap = 64 * _MIB                                   # conservative (v7x-sized)
    try:
        cap = int(getattr(pltpu.get_tpu_info(), "vmem_capacity_bytes", cap))
    except Exception:
        pass
    return int(max(32 * _MIB, min(cap - 16 * _MIB, 112 * _MIB)))


def _plan_tiles(N, L, Cin, Cout, k, itemsize, vmem_limit):
    """Pick (b_tile, l_tile) so double-buffered blocks + temporaries fit VMEM."""
    pad = k // 2
    lane = 128
    cin_l = _round_up(Cin, lane)
    kcin_l = _round_up(k * Cin, lane)
    cout_l = _round_up(Cout, lane)
    # Approximate VMEM bytes per output row (lane-rounded): double-buffered
    # input + output blocks, im2col lhs, f32 matmul result.
    per_row = (2 * cin_l * itemsize + kcin_l * itemsize
               + 2 * cout_l * itemsize + cout_l * 4)
    max_rows = max(8, int(vmem_limit * 0.6) // per_row)

    # L tile: full L if it fits, else the largest multiple-of-8 divisor of L.
    l_tile = L
    if L > max_rows:
        t = (max_rows // 8) * 8
        while t >= 8:
            if L % t == 0:
                l_tile = t
                break
            t -= 8
        # TODO(synk): L with no multiple-of-8 divisor <= max_rows falls back to
        # a single full-L block; a masked / halo-DMA partial L tile is needed
        # to cover that case without blowing VMEM.

    # Batch folding: target M = b_tile * l_tile ~ 2048 rows (amortizes the
    # ~0.35us per-grid-step overhead and fills the MXU), within the VMEM budget.
    target_rows = 2048
    if l_tile % 8 == 0:
        b_tile = max(1, min(N, max_rows // max(l_tile, 1),
                            pl.cdiv(target_rows, max(l_tile, 1))))
    else:
        b_tile = 1   # keep the (b, l, c) <-> (b*l, c) reshapes layout-preserving

    # Keep >= 2 parallel grid steps so both v7x TensorCores get work.
    n_l = L // l_tile
    while b_tile > 1 and pl.cdiv(N, b_tile) * n_l < 2:
        b_tile -= 1
    return b_tile, l_tile


def _dsconv_kernel(x_ref, wf_ref, b_ref, o_ref):
    """One (batch-tile, L-tile) step of the fused depthwise-separable conv.

    x_ref : (b_tile, l_tile + 2*pad, C_in)   halo-carrying input block (leading
                                             L-tile dim squeezed by BlockSpec)
    wf_ref: (k*C_in, C_out)                  fused depthwise*pointwise weight
    b_ref : (1, C_out)                       pointwise bias (f32)
    o_ref : (b_tile, l_tile, C_out)          output block
    """
    b_tile, l_tile, cout = o_ref.shape
    cin = x_ref.shape[-1]
    k = wf_ref.shape[0] // cin

    # im2col: k shifted slabs concatenated along the lane axis.
    # (Static-start ref slices; TODO(synk): if the bundle dump shows sublane
    #  retile copies here, switch to a single load + pltpu.roll per tap.)
    slabs = [x_ref[:, j:j + l_tile, :] for j in range(k)]
    lhs = slabs[0] if k == 1 else jnp.concatenate(slabs, axis=-1)
    # Layout-preserving collapse (l_tile % 8 == 0 or b_tile == 1 by planning).
    lhs = lhs.reshape(b_tile * l_tile, k * cin)

    # Single MXU matmul does depthwise + pointwise; f32 accumulation.
    y = jnp.dot(lhs, wf_ref[...], preferred_element_type=jnp.float32)
    y = jnp.maximum(y + b_ref[...].astype(jnp.float32), 0.0)
    o_ref[...] = y.reshape(b_tile, l_tile, cout).astype(o_ref.dtype)


def depthwise_separable_conv(x, w_dw, w_pw, b, *, k, matmul_dtype=None):
    """x: (N, L, C_in); w_dw: (k, C_in); w_pw: (C_in, C_out); b: (1, C_out).

    matmul_dtype: optional MXU operand dtype (e.g. jnp.bfloat16 on v5e for a
    ~3x MXU speedup at reduced precision). Defaults to x.dtype to preserve the
    PyTorch f32 numerics.
    """
    if k % 2 != 1:
        # TODO(synk): even k -> PyTorch Conv1d(padding=k//2) yields length L+1;
        # not reproduced here.
        raise NotImplementedError("only odd kernel sizes are supported")

    N, L, Cin = x.shape
    Cout = w_pw.shape[1]
    pad = k // 2
    mm_dtype = jnp.dtype(matmul_dtype) if matmul_dtype is not None else x.dtype

    # Fused weight: out[l,o] = sum_{j,c} x[l+j-pad, c] * w_dw[j,c] * w_pw[c,o].
    w_fused = (w_dw.astype(jnp.float32)[:, :, None]
               * w_pw.astype(jnp.float32)[None, :, :])          # (k, Cin, Cout)
    w_fused = w_fused.reshape(k * Cin, Cout).astype(mm_dtype)
    b_f32 = jnp.asarray(b, jnp.float32).reshape(1, Cout)

    vmem_limit = _vmem_limit_bytes()
    itemsize = max(jnp.dtype(mm_dtype).itemsize, jnp.dtype(x.dtype).itemsize)
    b_tile, l_tile = _plan_tiles(N, L, Cin, Cout, k, itemsize, vmem_limit)
    n_l = L // l_tile
    n_b = pl.cdiv(N, b_tile)

    # Zero-pad along L once in the wrapper (removes the in-kernel halo copy)
    # and split into halo-carrying L tiles: (n_l, N, l_tile + 2*pad, Cin).
    x_pad = jnp.pad(x.astype(mm_dtype), ((0, 0), (pad, pad), (0, 0)))
    if n_l == 1:
        x_blocks = x_pad[None]
    else:
        x_blocks = jnp.stack(
            [x_pad[:, i * l_tile:i * l_tile + l_tile + 2 * pad, :]
             for i in range(n_l)], axis=0)

    # TODO(synk): sweep pipeline_mode=pl.Buffered(3) on the x spec if xprof
    # shows exposed DMA waits on v5e/v6e (plenty of VMEM there).
    out = pl.pallas_call(
        _dsconv_kernel,
        out_shape=jax.ShapeDtypeStruct((N, L, Cout), x.dtype),
        grid_spec=pltpu.PrefetchScalarGridSpec(
            num_scalar_prefetch=0,
            grid=(n_b, n_l),
            in_specs=[
                pl.BlockSpec((pl.Squeezed(), b_tile, l_tile + 2 * pad, Cin),
                             lambda nb, nl: (nl, nb, 0, 0)),
                pl.BlockSpec((k * Cin, Cout), lambda nb, nl: (0, 0)),
                pl.BlockSpec((1, Cout), lambda nb, nl: (0, 0)),
            ],
            out_specs=pl.BlockSpec((b_tile, l_tile, Cout),
                                   lambda nb, nl: (nb, nl, 0)),
        ),
        compiler_params=pltpu.CompilerParams(
            dimension_semantics=("parallel", "parallel"),
            vmem_limit_bytes=vmem_limit,
        ),
    )(x_blocks, w_fused, b_f32)
    return out


def _reference(x, w_dw, w_pw, b, *, k):
    """Pure-JAX reference matching the PyTorch module semantics."""
    N, L, Cin = x.shape
    x_ncl = jnp.transpose(x, (0, 2, 1))                      # (N, Cin, L)
    w_dw_torch = jnp.transpose(w_dw, (1, 0))[:, None, :]     # (Cin, 1, k)
    dw = lax.conv_general_dilated(
        x_ncl, w_dw_torch,
        window_strides=(1,), padding=[(k // 2, k // 2)],
        dimension_numbers=("NCH", "OIH", "NCH"),
        feature_group_count=Cin)                             # (N, Cin, L)
    pw = jnp.einsum("ncl,co->nol", dw, w_pw) + b[0][None, :, None]
    out = jnp.maximum(pw, 0.0)                               # (N, Cout, L)
    return jnp.transpose(out, (0, 2, 1))                     # (N, L, Cout)


if __name__ == "__main__":
    N, L, Cin, Cout, K = 2, 16, 4, 8, 3

    key = jax.random.PRNGKey(0)
    kx, kdw, kpw, kb = jax.random.split(key, 4)

    x = jax.random.normal(kx, (N, L, Cin), dtype=jnp.float32)
    w_dw = jax.random.normal(kdw, (K, Cin), dtype=jnp.float32) * 0.2
    w_pw = jax.random.normal(kpw, (Cin, Cout), dtype=jnp.float32) * 0.2
    b = jax.random.normal(kb, (1, Cout), dtype=jnp.float32) * 0.1

    out = depthwise_separable_conv(x, w_dw, w_pw, b, k=K)
    out = jax.block_until_ready(out)

    ref = _reference(x, w_dw, w_pw, b, k=K)
    assert out.shape == (N, L, Cout)
    assert jnp.allclose(out, ref, atol=1e-4, rtol=1e-4), "mismatch vs reference"

    print("KERNEL_OK")
</pallas_src>

<mosaic_0001>
module attributes {stable_mosaic.version = 11 : i64} {
  func.func @_dsconv_kernel(%arg0: i32, %arg1: i32, %arg2: memref<1x1x18x4xf32, #tpu.memory_space<vmem>>, %arg3: memref<12x8xf32, #tpu.memory_space<vmem>>, %arg4: memref<1x8xf32, #tpu.memory_space<vmem>>, %arg5: memref<1x16x8xf32, #tpu.memory_space<vmem>>) attributes {dimension_semantics = [#tpu.dimension_semantics<parallel>, #tpu.dimension_semantics<parallel>], iteration_bounds = array<i64: 2, 1>, scalar_prefetch = 0 : i64, scratch_operands = 0 : i64, tpu.core_type = #tpu.core_type<tc>, window_params = [{transform_indices = @transform_0, window_bounds = array<i64: 1, 1, 18, 4>}, {pipeline_mode = #tpu.pipeline_mode<synchronous>, transform_indices = @transform_1, window_bounds = array<i64: 12, 8>}, {pipeline_mode = #tpu.pipeline_mode<synchronous>, transform_indices = @transform_2, window_bounds = array<i64: 1, 8>}, {transform_indices = @transform_3, window_bounds = array<i64: 1, 16, 8>}]} {
    %c0 = arith.constant 0 : index
    %c0_0 = arith.constant 0 : index
    %c0_1 = arith.constant 0 : index
    %c0_2 = arith.constant 0 : index
    %0 = vector.load %arg2[%c0, %c0_0, %c0_1, %c0_2] : memref<1x1x18x4xf32, #tpu.memory_space<vmem>>, vector<1x1x16x4xf32>
    %1 = vector.shape_cast %0 : vector<1x1x16x4xf32> to vector<1x16x4xf32>
    %c0_3 = arith.constant 0 : index
    %c0_4 = arith.constant 0 : index
    %c1 = arith.constant 1 : index
    %c0_5 = arith.constant 0 : index
    %2 = vector.load %arg2[%c0_3, %c0_4, %c1, %c0_5] : memref<1x1x18x4xf32, #tpu.memory_space<vmem>>, vector<1x1x16x4xf32>
    %3 = vector.shape_cast %2 : vector<1x1x16x4xf32> to vector<1x16x4xf32>
    %c0_6 = arith.constant 0 : index
    %c0_7 = arith.constant 0 : index
    %c2 = arith.constant 2 : index
    %c0_8 = arith.constant 0 : index
    %4 = vector.load %arg2[%c0_6, %c0_7, %c2, %c0_8] : memref<1x1x18x4xf32, #tpu.memory_space<vmem>>, vector<1x1x16x4xf32>
    %5 = vector.shape_cast %4 : vector<1x1x16x4xf32> to vector<1x16x4xf32>
    %6 = tpu.concatenate %1, %3, %5 in 2 : vector<1x16x4xf32>, vector<1x16x4xf32>, vector<1x16x4xf32> -> vector<1x16x12xf32>
    %7 = vector.shape_cast %6 : vector<1x16x12xf32> to vector<16x12xf32>
    %c0_9 = arith.constant 0 : index
    %c0_10 = arith.constant 0 : index
    %8 = vector.load %arg3[%c0_9, %c0_10] : memref<12x8xf32, #tpu.memory_space<vmem>>, vector<12x8xf32>
    %cst = arith.constant dense<0.000000e+00> : vector<16x8xf32>
    %9 = tpu.matmul %7, %8, %cst {dimension_numbers = #tpu.dot_dimension_numbers<[1], [0], [0], [1], [0, 0, 1, 1], [], []>} : vector<16x12xf32>, vector<12x8xf32>, vector<16x8xf32> -> vector<16x8xf32>
    %c0_11 = arith.constant 0 : index
    %c0_12 = arith.constant 0 : index
    %10 = vector.load %arg4[%c0_11, %c0_12] : memref<1x8xf32, #tpu.memory_space<vmem>>, vector<1x8xf32>
    %11 = vector.broadcast %10 : vector<1x8xf32> to vector<16x8xf32>
    %12 = arith.addf %9, %11 : vector<16x8xf32>
    %cst_13 = arith.constant 0.000000e+00 : f32
    %13 = vector.broadcast %cst_13 : f32 to vector<16x8xf32>
    %14 = arith.maximumf %12, %13 : vector<16x8xf32>
    %15 = vector.shape_cast %14 : vector<16x8xf32> to vector<1x16x8xf32>
    %c0_14 = arith.constant 0 : index
    %c0_15 = arith.constant 0 : index
    %c0_16 = arith.constant 0 : index
    %16 = vector.load %arg5[%c0_14, %c0_15, %c0_16] : memref<1x16x8xf32, #tpu.memory_space<vmem>>, vector<1x16x8xf32>
    tpu.vector_store %arg5[%c0_14, %c0_15, %c0_16], %15 {strides = array<i32>} : memref<1x16x8xf32, #tpu.memory_space<vmem>>, vector<1x16x8xf32>,
    return
  }
  func.func @transform_0(%arg0: i32, %arg1: i32) -> (i32, i32, i32, i32) {
    %c0_i32 = arith.constant 0 : i32
    %c0_i32_0 = arith.constant 0 : i32
    %c0_i32_1 = arith.constant 0 : i32
    return %arg1, %arg0, %c0_i32, %c0_i32_0 : i32, i32, i32, i32
  }
  func.func @transform_1(%arg0: i32, %arg1: i32) -> (i32, i32) {
    %c0_i32 = arith.constant 0 : i32
    %c0_i32_0 = arith.constant 0 : i32
    %c0_i32_1 = arith.constant 0 : i32
    return %c0_i32, %c0_i32_0 : i32, i32
  }
  func.func @transform_2(%arg0: i32, %arg1: i32) -> (i32, i32) {
    %c0_i32 = arith.constant 0 : i32
    %c0_i32_0 = arith.constant 0 : i32
    %c0_i32_1 = arith.constant 0 : i32
    return %c0_i32, %c0_i32_0 : i32, i32
  }
  func.func @transform_3(%arg0: i32, %arg1: i32) -> (i32, i32, i32) {
    %c0_i32 = arith.constant 0 : i32
    %c0_i32_0 = arith.constant 0 : i32
    return %arg0, %arg1, %c0_i32 : i32, i32, i32
  }
}

</mosaic_0001>

<llo_original>
// kernel: tpu_custom_call.1
$region0: #{tpu_custom_call.1}
  #allocation0 [shape = 'u32[]', space=smem, size = 0x4, offset = 0x4, fixed_abs, tag = 'smem constant byte address 0x4 - core index']
  #allocation1 [shape = 'u32[72,128]{1,0:T(1,128)}', space=vmem, size = 0x9000, scoped, tag = 'internal scratch']
  %s0 = inlined_call_operand.vmem [shape: f32[1,2,18,4], index: 0, kind: input, shape index: {}]
  %s1 = inlined_call_operand.vmem [shape: f32[12,8], index: 1, kind: input, shape index: {}]
  %s2 = inlined_call_operand.vmem [shape: f32[1,8], index: 2, kind: input, shape index: {}]
  %s3 = inlined_call_operand.vmem [shape: f32[2,16,8], index: 3, kind: output, shape index: {}]
  %s4 = sld [smem:[#allocation0]]
  $region45: #{tpu_custom_call.1} parent=0
    _
  %s6 = ssub.s32 1, %s4
  %s7 = scalar_select 0, %s6, %s4
  loop: start=0, step=1, limit=4
  $region2: #{tpu_custom_call.1} parent=0 // loop_pre_header
    _
  $region3: #{tpu_custom_call.1} parent=0 // loop_header
    %s9 = sphi 0, %s13
    %p10 = scmp.ge.s32.totalorder %s9, 4
    %s16 = sphi 0, %s28
    %s17 = sphi 0, %s24
    %s18 = sphi 0, %s16
    %s19 = sphi 0, %s17
    %s20 = sphi 0, %s18
    %s21 = sphi 0, %s19
    %s33 = sphi 0, %s35
    %s36 = sphi 0, %s33
    %s37 = sphi 0, %s36
    %s53 = sphi 0, %s37
    %s57 = sphi 0, %s57
    %s59 = sphi 0, %s57
    %s60 = sphi 0, %s59
    %s74 = sphi 0, %s60
    %s78 = sphi 0, %s78
    %s80 = sphi 0, %s78
    %s81 = sphi 0, %s80
    %s95 = sphi 0, %s81
    %s103 = sphi 0, %s105
    %s106 = sphi 0, %s103
    %s107 = sphi 0, %s106
    %s123 = sphi 0, %s107
  $region4: #{tpu_custom_call.1} parent=0 // loop_header_branch
    %12 = sbr.rel (%p10) target = $region8
  $region5: #{tpu_custom_call.1} parent=0 // loop_body
    %s14 = ssub.s32 %s9, 1
    %s15 = ssub.s32 %s9, 2
    %s22 = sadd.s32 1, %s17
    %p23 = scmp.ge.s32.totalorder %s22, 1
    %s24 = scalar_select %p23, 0, %s22
    %s25 = sadd.s32 1, %s16
    %s26 = scalar_select %p23, %s25, %s16
    %p27 = scmp.ge.s32.totalorder %s26, 2
    %s28 = scalar_select %p27, 0, %s26
    %s29 = ssub.s32 %s17, %s24
    %s30 = ssub.s32 %s16, %s28
    %s31 = sor.u32 %s29, %s30
    %p32 = scmp.eq.s32.totalorder %s31, 0
    %s34 = sadd.s32 %s33, 1
    %s35 = scalar_select %p32, %s33, %s34
    %p38 = pneg %p32
    %p39 = scmp.eq.s32.totalorder %s9, 1
    %p40 = por %p38, %p39
    %p41 = scmp.ne.s32.totalorder %s33, %s36
    %p42 = scmp.eq.s32.totalorder %s9, 0
    %p43 = por %p41, %p42
    %p44 = scmp.ne.s32.totalorder %s33, %s36
    %p45 = scmp.eq.s32.totalorder %s14, 1
    %p46 = por %p44, %p45
    %p47 = scmp.ne.s32.totalorder %s36, %s37
    %p48 = scmp.eq.s32.totalorder %s14, 0
    %p49 = por %p47, %p48
    %p50 = scmp.ne.s32.totalorder %s36, %s37
    %p51 = scmp.eq.s32.totalorder %s15, 1
    %p52 = por %p50, %p51
    %p54 = scmp.ne.s32.totalorder %s37, %s53
    %p55 = scmp.eq.s32.totalorder %s15, 0
    %p56 = por %p54, %p55
    %s58 = sadd.s32 %s57, 1
    %p61 = scmp.eq.s32.totalorder %s9, 1
    %p62 = scmp.ne.s32.totalorder %s57, %s59
    %p63 = scmp.eq.s32.totalorder %s9, 0
    %p64 = por %p62, %p63
    %p65 = scmp.ne.s32.totalorder %s57, %s59
    %p66 = scmp.eq.s32.totalorder %s14, 1
    %p67 = por %p65, %p66
    %p68 = scmp.ne.s32.totalorder %s59, %s60
    %p69 = scmp.eq.s32.totalorder %s14, 0
    %p70 = por %p68, %p69
    %p71 = scmp.ne.s32.totalorder %s59, %s60
    %p72 = scmp.eq.s32.totalorder %s15, 1
    %p73 = por %p71, %p72
    %p75 = scmp.ne.s32.totalorder %s60, %s74
    %p76 = scmp.eq.s32.totalorder %s15, 0
    %p77 = por %p75, %p76
    %s79 = sadd.s32 %s78, 1
    %p82 = scmp.eq.s32.totalorder %s9, 1
    %p83 = scmp.ne.s32.totalorder %s78, %s80
    %p84 = scmp.eq.s32.totalorder %s9, 0
    %p85 = por %p83, %p84
    %p86 = scmp.ne.s32.totalorder %s78, %s80
    %p87 = scmp.eq.s32.totalorder %s14, 1
    %p88 = por %p86, %p87
    %p89 = scmp.ne.s32.totalorder %s80, %s81
    %p90 = scmp.eq.s32.totalorder %s14, 0
    %p91 = por %p89, %p90
    %p92 = scmp.ne.s32.totalorder %s80, %s81
    %p93 = scmp.eq.s32.totalorder %s15, 1
    %p94 = por %p92, %p93
    %p96 = scmp.ne.s32.totalorder %s81, %s95
    %p97 = scmp.eq.s32.totalorder %s15, 0
    %p98 = por %p96, %p97
    %s99 = ssub.s32 %s16, %s28
    %s100 = ssub.s32 %s17, %s24
    %s101 = sor.u32 %s99, %s100
    %p102 = scmp.eq.s32.totalorder %s101, 0
    %s104 = sadd.s32 %s103, 1
    %s105 = scalar_select %p102, %s103, %s104
    %p108 = pneg %p102
    %p109 = scmp.eq.s32.totalorder %s9, 1
    %p110 = por %p108, %p109
    %p111 = scmp.ne.s32.totalorder %s103, %s106
    %p112 = scmp.eq.s32.totalorder %s9, 0
    %p113 = por %p111, %p112
    %p114 = scmp.ne.s32.totalorder %s103, %s106
    %p115 = scmp.eq.s32.totalorder %s14, 1
    %p116 = por %p114, %p115
    %p117 = scmp.ne.s32.totalorder %s106, %s107
    %p118 = scmp.eq.s32.totalorder %s14, 0
    %p119 = por %p117, %p118
    %p120 = scmp.ne.s32.totalorder %s106, %s107
    %p121 = scmp.eq.s32.totalorder %s15, 1
    %p122 = por %p120, %p121
    %p124 = scmp.ne.s32.totalorder %s107, %s123
    %p125 = scmp.eq.s32.totalorder %s15, 0
    %p126 = por %p124, %p125
    %p127 = scmp.le.s32.totalorder 1, %s9
    %p128 = scmp.lt.s32.totalorder %s9, 3
    %p129 = pnand %p127, %p128
    %p130 = pneg %p129
    // Predicated region
    $region9: #{tpu_custom_call.1} parent=5 // pred_check
      _
    $region10: #{tpu_custom_call.1} parent=5 // pred_check_branch
      %132 = sbr.rel (%p129) target = $region12
    $region11: #{tpu_custom_call.1} parent=5 // pred_region
      %s133 = ssub.s32 %s9, 1
      // Predicated region
      $region13: #{tpu_custom_call.1} parent=11 // pred_check
        %p134 = pneg %p70
      $region14: #{tpu_custom_call.1} parent=11 // pred_check_branch
        %136 = sbr.rel (%p134) target = $region16
      $region15: #{tpu_custom_call.1} parent=11 // pred_region
        _
      $region16: #{tpu_custom_call.1} parent=11 // pred_fallthru
        _
      // Predicated region
      $region17: #{tpu_custom_call.1} parent=11 // pred_check
        %p137 = pneg %p91
      $region18: #{tpu_custom_call.1} parent=11 // pred_check_branch
        %139 = sbr.rel (%p137) target = $region20
      $region19: #{tpu_custom_call.1} parent=11 // pred_region
        _
      $region20: #{tpu_custom_call.1} parent=11 // pred_fallthru
        _
    $region12: #{tpu_custom_call.1} parent=5 // pred_fallthru
      _
    %p140 = scmp.lt.s32.totalorder %s9, 2
    // Predicated region
    $region21: #{tpu_custom_call.1} parent=5 // pred_check
      %p141 = pneg %p140
    $region22: #{tpu_custom_call.1} parent=5 // pred_check_branch
      %143 = sbr.rel (%p141) target = $region24
    $region23: #{tpu_custom_call.1} parent=5 // pred_region
      // Predicated region
      $region25: #{tpu_custom_call.1} parent=23 // pred_check
        %p144 = pneg %p43
      $region26: #{tpu_custom_call.1} parent=23 // pred_check_branch
        %146 = sbr.rel (%p144) target = $region28
      $region27: #{tpu_custom_call.1} parent=23 // pred_region
        %p147 = scmp.lt.s32.totalorder %s17, 0
        %s148 = scalar_select %p147, %s17, 0
        %p149 = scmp.lt.s32.totalorder %s16, 1
        %s150 = scalar_select %p149, %s16, 1
        %s151 = smul.addr %s150, 3
        %s152 = smul.addr %s148, 6
        %s153 = sadd.s32 %s151, %s152
        %s154 = smul.addr %s153, 8
        %s155 = scalar_lea.vmem %s0, %s154
      $region28: #{tpu_custom_call.1} parent=23 // pred_fallthru
        _
    $region24: #{tpu_custom_call.1} parent=5 // pred_fallthru
      _
    %p156 = scmp.le.s32.totalorder 1, %s9
    %p157 = scmp.lt.s32.totalorder %s9, 3
    %p158 = pnand %p156, %p157
    %p159 = pneg %p158
    // Predicated region
    $region29: #{tpu_custom_call.1} parent=5 // pred_check
      _
    $region30: #{tpu_custom_call.1} parent=5 // pred_check_branch
      %161 = sbr.rel (%p158) target = $region32
    $region31: #{tpu_custom_call.1} parent=5 // pred_region
      %s162 = ssub.s32 %s9, 1
      %p163 = scmp.lt.s32.totalorder %s19, 0
      %s164 = scalar_select %p163, %s19, 0
      %p165 = scmp.lt.s32.totalorder %s18, 1
      %s166 = scalar_select %p165, %s18, 1
      %s167 = smul.addr %s166, 3
      %s168 = smul.addr %s164, 6
      %s169 = sadd.s32 %s167, %s168
      %s170 = smul.addr %s169, 8
      %s171 = scalar_lea.vmem %s0, %s170
      %p172 = pneg %p49
      %p173 = pneg %p46
      %p174 = pneg %p70
      %p175 = pneg %p67
      %p176 = pneg %p91
      %p177 = pneg %p88
      %p178 = pneg %p119
      %p179 = pneg %p116
      %s180 = smul.u32 2, %s19
      %p181 = scmp.lt.s32.totalorder %s18, 1
      %s182 = scalar_select %p181, %s18, 1
      %p183 = scmp.lt.s32.totalorder %s180, 1
      %s184 = scalar_select %p183, %s180, 1
      %s185 = smul.addr %s182, 2
      %s186 = sadd.s32 %s184, %s185
      %s187 = smul.addr %s186, 8
      %s188 = scalar_lea.vmem %s3, %s187
      %p189 = scmp.lt.s32.totalorder %s19, 0
      %s190 = scalar_select %p189, %s19, 0
      %p191 = scmp.lt.s32.totalorder %s18, 1
      %s192 = scalar_select %p191, %s18, 1
      %s193 = smul.addr %s192, 3
      %s194 = smul.addr %s190, 6
      %s195 = sadd.s32 %s193, %s194
      %s196 = smul.addr %s195, 8
      %s197 = scalar_lea.vmem %s0, %s196
      %s198 = smul.u32 2, %s19
      %p199 = scmp.lt.s32.totalorder %s18, 1
      %s200 = scalar_select %p199, %s18, 1
      %p201 = scmp.lt.s32.totalorder %s198, 1
      %s202 = scalar_select %p201, %s198, 1
      %s203 = smul.addr %s200, 2
      %s204 = sadd.s32 %s202, %s203
      %s205 = smul.addr %s204, 8
      %s206 = scalar_lea.vmem %s3, %s205
      %s207 = smul.u32 2, %s19
      %v208 = vld [vmem:[%s197] sm:$0xff]
      %v209 = vld [vmem:[%s197 + $0x8] sm:$0xff]
      %v210 = vld [vmem:[%s197 + $0x1] sm:$0xff]
      %v211 = vld [vmem:[%s197 + $0x9] sm:$0xff]
      %v212 = vld [vmem:[%s197 + $0x2] sm:$0xff]
      %v213 = vld [vmem:[%s197 + $0xa] sm:$0xff]
      %216 = vrot.lane.b32.xlu0 %v210, 4
      %v217 = vpop.permute.xlu0 %216
      %218 = vrot.lane.b32.xlu0 %v211, 4
      %v219 = vpop.permute.xlu0 %218
      %224 = vrot.lane.b32.xlu0 %v212, 8
      %v225 = vpop.permute.xlu0 %224
      %226 = vrot.lane.b32.xlu0 %v213, 8
      %v227 = vpop.permute.xlu0 %226
      %vm230 = vcmask 31744
      %v231 = vsel %vm230, %v208, %v217
      %v232 = vsel %vm230, %v209, %v219
      %vm233 = vcmask 64512
      %v234 = vsel %vm233, %v231, %v225
      %v235 = vsel %vm233, %v232, %v227
      %v236 = vld [vmem:[%s1] sm:$0xff]
      %v237 = vld [vmem:[%s1 + $0x8] sm:$0xf]
      %v238 = vld [vmem:[%s2] sm:$0x1]
      %v240 = vperm.slane %v238, 0
      %vm242 = vcmask 97280
      %v244 = vsel %vm242, %v234, 0
      %v247 = vsel %vm242, %v235, 0
      %vm249 = vcmask 1043456
      %v251 = vsel %vm249, %v237, 0
      %253 = vmatpush.msra.mxu0 0.0
      %254 = vmatpush.msra.mxu0 0.0
      %255 = vmatpush.msra.mxu0 0.0
      %256 = vmatpush.msra.mxu0 0.0
      %257 = vmatpush.msra.mxu0 0.0
      %258 = vmatpush.msra.mxu0 0.0
      %259 = vmatpush.msra.mxu0 0.0
      %260 = vmatpush.msra.mxu0 0.0
      %261 = vmatpush.msra.mxu0 0.0
      %262 = vmatpush.msra.mxu0 0.0
      %263 = vmatpush.msra.mxu0 0.0
      %264 = vmatpush.msra.mxu0 0.0
      %265 = vmatpush.msra.mxu0 0.0
      %266 = vmatpush.msra.mxu0 0.0
      %267 = vmatpush.msra.mxu0 %v251
      %268 = vmatpush.msra.mxu0 %v236
      %269 = vmatmul.f32.gmra.mxu0 %v244
      %v270 = vpop.f32.mrf.mxu0
      %v271 = vadd.f32 %v240, %v270
      %272 = vmatmul.f32.gmra.mxu0 %v247
      %v273 = vpop.f32.mrf.mxu0
      %v274 = vadd.f32 %v240, %v273
      %275 = vdwg.mxu0
      %v276 = vmax.f32 %v271, 0.0
      %v277 = vmax.f32 %v274, 0.0
      %278 = vst.msk [vmem:[%s206] sm:$0xff] %vm233, %v276
      %279 = vst.msk [vmem:[%s206 + $0x8] sm:$0xff] %vm233, %v277
      %s280 = smul.u32 2, %s19
      %p281 = scmp.lt.s32.totalorder %s18, 1
      %s282 = scalar_select %p281, %s18, 1
      %p283 = scmp.lt.s32.totalorder %s280, 1
      %s284 = scalar_select %p283, %s280, 1
      %s285 = smul.addr %s282, 2
      %s286 = sadd.s32 %s284, %s285
      %s287 = smul.addr %s286, 8
      %s288 = scalar_lea.vmem %s3, %s287
      // Predicated region
      $region33: #{tpu_custom_call.1} parent=31 // pred_check
        %p289 = pneg %p116
      $region34: #{tpu_custom_call.1} parent=31 // pred_check_branch
        %291 = sbr.rel (%p289) target = $region36
      $region35: #{tpu_custom_call.1} parent=31 // pred_region
        %s292 = smul.u32 2, %s19
      $region36: #{tpu_custom_call.1} parent=31 // pred_fallthru
        _
    $region32: #{tpu_custom_call.1} parent=5 // pred_fallthru
      _
    %p293 = scmp.le.s32.totalorder 2, %s9
    // Predicated region
    $region37: #{tpu_custom_call.1} parent=5 // pred_check
      %p294 = pneg %p293
    $region38: #{tpu_custom_call.1} parent=5 // pred_check_branch
      %296 = sbr.rel (%p294) target = $region40
    $region39: #{tpu_custom_call.1} parent=5 // pred_region
      %s297 = ssub.s32 %s9, 2
      // Predicated region
      $region41: #{tpu_custom_call.1} parent=39 // pred_check
        %p298 = pneg %p122
      $region42: #{tpu_custom_call.1} parent=39 // pred_check_branch
        %300 = sbr.rel (%p298) target = $region44
      $region43: #{tpu_custom_call.1} parent=39 // pred_region
        %s301 = smul.u32 2, %s21
        %p302 = scmp.lt.s32.totalorder %s20, 1
        %s303 = scalar_select %p302, %s20, 1
        %p304 = scmp.lt.s32.totalorder %s301, 1
        %s305 = scalar_select %p304, %s301, 1
        %s306 = smul.addr %s303, 2
        %s307 = sadd.s32 %s305, %s306
        %s308 = smul.addr %s307, 8
        %s309 = scalar_lea.vmem %s3, %s308
      $region44: #{tpu_custom_call.1} parent=39 // pred_fallthru
        _
    $region40: #{tpu_custom_call.1} parent=5 // pred_fallthru
      _
  $region6: #{tpu_custom_call.1} parent=0 // loop_footer
    %s13 = sadd.s32 1, %s9
  $region7: #{tpu_custom_call.1} parent=0 // loop_footer_branch
    %8 = sbr.rel target = $region3
  $region8: #{tpu_custom_call.1} parent=0 // loop_exit
    _

</llo_original>
